<compile_context>
chip_gen: v6e
topology: v6e:2x2x1
jax: 0.10.0
libtpu: 0.0.40
codegen_flags: <defaults>
</compile_context>

<pallas_src>
import jax
import jax.numpy as jnp
from jax import lax
from jax.experimental import pallas as pl
from jax.experimental.pallas import tpu as pltpu


# --------------------------------------------------------------- kernels -----

def conv_bn_stats_kernel(p_ref, w_ref, b_ref, y_ref, s_ref, ss_ref):
    # p_ref : (27*Cin, TM)   bf16 im2col patch columns for TM output voxels
    # w_ref : (Cout, 27*Cin) bf16 folded conv weights
    # b_ref : (Cout, 1)      f32 conv bias
    # y_ref : (Cout, TM)     f32 conv + bias tile (lane-dense: TM % 128 == 0)
    # s_ref : (1, Cout, 1)   per-tile sum        of the PRE-BIAS conv output
    # ss_ref: (1, Cout, 1)   per-tile sum of x^2 of the PRE-BIAS conv output
    y = jnp.dot(w_ref[...], p_ref[...], preferred_element_type=jnp.float32)
    s_ref[...] = jnp.sum(y, axis=1, keepdims=True).reshape(s_ref.shape)
    ss_ref[...] = jnp.sum(y * y, axis=1, keepdims=True).reshape(ss_ref.shape)
    y_ref[...] = y + b_ref[...]


def bn_relu_kernel(x_ref, scale_ref, shift_ref, o_ref):
    # x_ref/o_ref: (Cout, TC) lane-dense blocks; scale/shift: (Cout, 1) columns.
    o_ref[...] = jnp.maximum(x_ref[...] * scale_ref[...] + shift_ref[...], 0.0)


# --------------------------------------------------------- tiling helpers ----

def _round_up(x, m):
    return ((x + m - 1) // m) * m


def _vmem_capacity_bytes():
    """Physical VMEM of this generation (64 MiB/core on v7x, 128 MiB on v5e/v6e);
    used to derive generation-aware tile + scoped-VMEM budgets."""
    try:
        return int(pltpu.get_tpu_info().vmem_capacity_bytes)
    except Exception:                      # conservative fallback (v7x-sized)
        return 64 * 1024 * 1024


def _pick_tile(count, unit, bytes_per, target_bytes, cap):
    """Largest multiple of `unit` within the byte budget / cap, clamped so the
    'parallel' grid axis keeps at least two steps when there is enough work."""
    t = (min(target_bytes // max(bytes_per, 1), cap) // unit) * unit
    t = max(t, unit)
    t = min(t, _round_up(count, unit))
    if count > unit:
        t = min(t, max(_round_up((count + 1) // 2, unit), unit))
    return t


def _divisor_tile(count, unit, bytes_per, target_bytes, cap, min_tiles=2):
    """Largest multiple-of-`unit` divisor of `count` (count % unit == 0) within
    the byte budget, preferring at least `min_tiles` grid steps."""
    budget = max(unit, (min(target_bytes // max(bytes_per, 1), cap) // unit) * unit)
    best = unit
    d = unit
    while d <= count:
        if count % d == 0 and d <= budget and (count // d >= min_tiles or count == unit):
            best = d
        d += unit
    return best


# ---------------------------------------------------------------- forward ----

def _single_conv_forward(x_ncdhw, weight, bias, gamma, beta, eps=1e-5):
    """SingleConv forward. x_ncdhw: (N, Cin, D, H, W) like PyTorch NCDHW."""
    N, Cin, D, H, W = x_ncdhw.shape
    Cout = weight.shape[0]
    M = N * D * H * W
    K = 27 * Cin

    # ---- generation-aware budgets (v7x: 64 MiB VMEM, v5e/v6e: 128 MiB) -------
    vmem_cap = _vmem_capacity_bytes()
    vmem_limit = int(min(96 * 1024 * 1024, vmem_cap * 3 // 4))
    tile_budget1 = int(min(4 * 1024 * 1024, vmem_cap // 16))
    tile_budget2 = int(min(4 * 1024 * 1024, vmem_cap // 24))

    # ---- XLA-side glue: channel-major bf16 im2col -----------------------------
    # (Cin, N, D, H, W): outer-axes-only transpose (contiguous D*H*W inner chunks).
    x_cf = jnp.transpose(x_ncdhw, (1, 0, 2, 3, 4)).astype(jnp.bfloat16)
    x_pad = jnp.pad(x_cf, ((0, 0), (0, 0), (1, 1), (1, 1), (1, 1)))
    cols = []
    for kd in range(3):
        for kh in range(3):
            for kw in range(3):
                sl = lax.slice(x_pad, (0, 0, kd, kh, kw),
                               (Cin, N, kd + D, kh + H, kw + W))
                cols.append(sl.reshape(Cin, M))
    patches = jnp.concatenate(cols, axis=0)                  # (27*Cin, M), bf16
    # TODO(synk): replace the materialized im2col with in-kernel halo DMA
    # (memory_space=pl.ANY + pltpu.make_async_copy): ~27x -> ~1x conv-input HBM.

    # Weight row ordering matches the patch row ordering (tap-major, Cin-minor).
    w2 = jnp.transpose(weight, (0, 2, 3, 4, 1)).reshape(Cout, K).astype(jnp.bfloat16)
    b_col = bias.reshape(Cout, 1).astype(jnp.float32)

    # ---- pass 1: conv (single K=27*Cin MXU matmul / tile) + partial BN stats ---
    bpr1 = 2 * K + 4 * Cout                  # bf16 patch column + f32 output column
    TM = _pick_tile(M, 128, bpr1, tile_budget1, cap=1024)
    M_pad = _round_up(M, TM)
    n_tiles = M_pad // TM
    if M_pad != M:                           # zero columns: 0 contribution to stats
        patches = jnp.pad(patches, ((0, 0), (0, M_pad - M)))

    conv_y, psum, psumsq = pl.pallas_call(
        conv_bn_stats_kernel,
        out_shape=(
            jax.ShapeDtypeStruct((Cout, M_pad), jnp.float32),
            jax.ShapeDtypeStruct((n_tiles, Cout, 1), jnp.float32),
            jax.ShapeDtypeStruct((n_tiles, Cout, 1), jnp.float32),
        ),
        grid=(n_tiles,),
        in_specs=[
            pl.BlockSpec((K, TM), lambda i: (0, i)),
            pl.BlockSpec((Cout, K), lambda i: (0, 0)),
            pl.BlockSpec((Cout, 1), lambda i: (0, 0)),
        ],
        out_specs=(
            pl.BlockSpec((Cout, TM), lambda i: (0, i)),
            pl.BlockSpec((1, Cout, 1), lambda i: (i, 0, 0)),
            pl.BlockSpec((1, Cout, 1), lambda i: (i, 0, 0)),
        ),
        compiler_params=pltpu.CompilerParams(
            dimension_semantics=("parallel",),
            vmem_limit_bytes=vmem_limit),
        cost_estimate=pl.CostEstimate(
            flops=2 * M_pad * K * Cout + 4 * M_pad * Cout,
            transcendentals=0,
            bytes_accessed=2 * M_pad * K + 2 * K * Cout + 4 * Cout
                           + 4 * M_pad * Cout + 8 * n_tiles * Cout),
    )(patches, w2, b_col)

    # ---- BN batch statistics from the per-tile partials (pre-bias sums, so a
    #      large bias does not cancel in E[x^2] - E[x]^2) ------------------------
    s = jnp.sum(psum, axis=(0, 2))
    ss = jnp.sum(psumsq, axis=(0, 2))
    mean_nb = s / M
    var = jnp.maximum(ss / M - mean_nb * mean_nb, 0.0)       # biased var (train mode)
    mean = mean_nb + bias.astype(jnp.float32)
    scale = gamma.astype(jnp.float32) * lax.rsqrt(var + eps)
    shift = beta.astype(jnp.float32) - mean * scale

    # ---- pass 2: lane-dense fused BN scale/shift + ReLU, in place --------------
    bpr2 = 8 * Cout                          # f32 read + f32 write per column
    TC = _divisor_tile(M_pad, 128, bpr2, tile_budget2, cap=1 << 17)
    c_tiles = M_pad // TC
    if c_tiles >= 4:                         # deeper buffering only if there is
        x_spec = pl.BlockSpec((Cout, TC), lambda i: (0, i),   # something to pipeline
                              pipeline_mode=pl.Buffered(3))
    else:
        x_spec = pl.BlockSpec((Cout, TC), lambda i: (0, i))

    out_cf = pl.pallas_call(
        bn_relu_kernel,
        out_shape=jax.ShapeDtypeStruct((Cout, M_pad), jnp.float32),
        grid=(c_tiles,),
        in_specs=[
            x_spec,
            pl.BlockSpec((Cout, 1), lambda i: (0, 0)),
            pl.BlockSpec((Cout, 1), lambda i: (0, 0)),
        ],
        out_specs=pl.BlockSpec((Cout, TC), lambda i: (0, i)),
        input_output_aliases={0: 0},         # BN+ReLU in place: no extra HBM alloc
        compiler_params=pltpu.CompilerParams(
            dimension_semantics=("parallel",),
            vmem_limit_bytes=vmem_limit),
        cost_estimate=pl.CostEstimate(
            flops=3 * M_pad * Cout,
            transcendentals=0,
            bytes_accessed=8 * M_pad * Cout + 8 * Cout),
    )(conv_y, scale.reshape(Cout, 1), shift.reshape(Cout, 1))

    # ---- back to the module's NCDHW layout (outer-axes transpose only) ---------
    out = out_cf[:, :M].reshape(Cout, N, D, H, W)
    return jnp.transpose(out, (1, 0, 2, 3, 4))


single_conv_forward = jax.jit(_single_conv_forward)


# -------------------------------------------------------------- reference ----

def reference_forward(x_ncdhw, weight, bias, gamma, beta, eps=1e-5):
    """Pure-JAX reference (matches PyTorch SingleConv in train mode)."""
    conv = lax.conv_general_dilated(
        x_ncdhw.astype(jnp.float32), weight.astype(jnp.float32),
        window_strides=(1, 1, 1), padding=[(1, 1)] * 3,
        dimension_numbers=("NCDHW", "OIDHW", "NCDHW"))
    conv = conv + bias.reshape(1, -1, 1, 1, 1)
    mean = jnp.mean(conv, axis=(0, 2, 3, 4), keepdims=True)
    var = jnp.mean((conv - mean) ** 2, axis=(0, 2, 3, 4), keepdims=True)
    y = (conv - mean) / jnp.sqrt(var + eps)
    y = y * gamma.reshape(1, -1, 1, 1, 1) + beta.reshape(1, -1, 1, 1, 1)
    return jnp.maximum(y, 0.0)


if __name__ == "__main__":
    # Small, deterministic setup: in_ch=4, out_ch=8, batch=2, spatial=8^3.
    key = jax.random.PRNGKey(0)
    k_x, k_w, k_b, k_g, k_beta = jax.random.split(key, 5)

    N, Cin, Cout, D, H, W = 2, 4, 8, 8, 8, 8
    x = jax.random.normal(k_x, (N, Cin, D, H, W), dtype=jnp.float32)
    weight = jax.random.normal(k_w, (Cout, Cin, 3, 3, 3), dtype=jnp.float32) * 0.1
    bias = jax.random.normal(k_b, (Cout,), dtype=jnp.float32) * 0.1
    gamma = 1.0 + 0.1 * jax.random.normal(k_g, (Cout,), dtype=jnp.float32)
    beta = 0.1 * jax.random.normal(k_beta, (Cout,), dtype=jnp.float32)

    out = jax.block_until_ready(single_conv_forward(x, weight, bias, gamma, beta))
    ref = jax.block_until_ready(reference_forward(x, weight, bias, gamma, beta))

    assert out.shape == (N, Cout, D, H, W)
    # bf16 MXU operands vs the f32 reference: tolerance loosened from 1e-4.
    assert jnp.allclose(out, ref, atol=5e-2, rtol=5e-2), "mismatch vs reference"

    print("KERNEL_OK")
</pallas_src>

<mosaic_0001>
module attributes {stable_mosaic.version = 11 : i64} {
  func.func @conv_bn_stats_kernel(%arg0: i32, %arg1: memref<108x512xbf16, #tpu.memory_space<vmem>>, %arg2: memref<8x108xbf16, #tpu.memory_space<vmem>>, %arg3: memref<8x1xf32, #tpu.memory_space<vmem>>, %arg4: memref<8x512xf32, #tpu.memory_space<vmem>>, %arg5: memref<1x8x1xf32, #tpu.memory_space<vmem>>, %arg6: memref<1x8x1xf32, #tpu.memory_space<vmem>>) attributes {dimension_semantics = [#tpu.dimension_semantics<parallel>], iteration_bounds = array<i64: 2>, scalar_prefetch = 0 : i64, scratch_operands = 0 : i64, tpu.core_type = #tpu.core_type<tc>, window_params = [{transform_indices = @transform_0, window_bounds = array<i64: 108, 512>}, {pipeline_mode = #tpu.pipeline_mode<synchronous>, transform_indices = @transform_1, window_bounds = array<i64: 8, 108>}, {pipeline_mode = #tpu.pipeline_mode<synchronous>, transform_indices = @transform_2, window_bounds = array<i64: 8, 1>}, {transform_indices = @transform_3, window_bounds = array<i64: 8, 512>}, {transform_indices = @transform_4, window_bounds = array<i64: 1, 8, 1>}, {transform_indices = @transform_5, window_bounds = array<i64: 1, 8, 1>}]} {
    %c0 = arith.constant 0 : index
    %c0_0 = arith.constant 0 : index
    %0 = vector.load %arg2[%c0, %c0_0] : memref<8x108xbf16, #tpu.memory_space<vmem>>, vector<8x108xbf16>
    %c0_1 = arith.constant 0 : index
    %c0_2 = arith.constant 0 : index
    %1 = vector.load %arg1[%c0_1, %c0_2] : memref<108x512xbf16, #tpu.memory_space<vmem>>, vector<108x512xbf16>
    %cst = arith.constant dense<0.000000e+00> : vector<8x512xf32>
    %2 = tpu.matmul %0, %1, %cst {dimension_numbers = #tpu.dot_dimension_numbers<[1], [0], [0], [1], [0, 0, 1, 1], [], []>} : vector<8x108xbf16>, vector<108x512xbf16>, vector<8x512xf32> -> vector<8x512xf32>
    %cst_3 = arith.constant dense<0.000000e+00> : vector<8xf32>
    %3 = vector.multi_reduction <add>, %2, %cst_3 [1] : vector<8x512xf32> to vector<8xf32>
    %4 = vector.shape_cast %3 : vector<8xf32> to vector<8x1xf32>
    %5 = vector.shape_cast %4 : vector<8x1xf32> to vector<1x8x1xf32>
    %c0_4 = arith.constant 0 : index
    %c0_5 = arith.constant 0 : index
    %c0_6 = arith.constant 0 : index
    %6 = vector.load %arg5[%c0_4, %c0_5, %c0_6] : memref<1x8x1xf32, #tpu.memory_space<vmem>>, vector<1x8x1xf32>
    tpu.vector_store %arg5[%c0_4, %c0_5, %c0_6], %5 {strides = array<i32>} : memref<1x8x1xf32, #tpu.memory_space<vmem>>, vector<1x8x1xf32>,
    %7 = arith.mulf %2, %2 : vector<8x512xf32>
    %cst_7 = arith.constant dense<0.000000e+00> : vector<8xf32>
    %8 = vector.multi_reduction <add>, %7, %cst_7 [1] : vector<8x512xf32> to vector<8xf32>
    %9 = vector.shape_cast %8 : vector<8xf32> to vector<8x1xf32>
    %10 = vector.shape_cast %9 : vector<8x1xf32> to vector<1x8x1xf32>
    %c0_8 = arith.constant 0 : index
    %c0_9 = arith.constant 0 : index
    %c0_10 = arith.constant 0 : index
    %11 = vector.load %arg6[%c0_8, %c0_9, %c0_10] : memref<1x8x1xf32, #tpu.memory_space<vmem>>, vector<1x8x1xf32>
    tpu.vector_store %arg6[%c0_8, %c0_9, %c0_10], %10 {strides = array<i32>} : memref<1x8x1xf32, #tpu.memory_space<vmem>>, vector<1x8x1xf32>,
    %c0_11 = arith.constant 0 : index
    %c0_12 = arith.constant 0 : index
    %12 = vector.load %arg3[%c0_11, %c0_12] : memref<8x1xf32, #tpu.memory_space<vmem>>, vector<8x1xf32>
    %13 = vector.broadcast %12 : vector<8x1xf32> to vector<8x512xf32>
    %14 = arith.addf %2, %13 : vector<8x512xf32>
    %c0_13 = arith.constant 0 : index
    %c0_14 = arith.constant 0 : index
    %15 = vector.load %arg4[%c0_13, %c0_14] : memref<8x512xf32, #tpu.memory_space<vmem>>, vector<8x512xf32>
    tpu.vector_store %arg4[%c0_13, %c0_14], %14 {strides = array<i32>} : memref<8x512xf32, #tpu.memory_space<vmem>>, vector<8x512xf32>,
    return
  }
  func.func @transform_0(%arg0: i32) -> (i32, i32) {
    %c0_i32 = arith.constant 0 : i32
    %c0_i32_0 = arith.constant 0 : i32
    return %c0_i32, %arg0 : i32, i32
  }
  func.func @transform_1(%arg0: i32) -> (i32, i32) {
    %c0_i32 = arith.constant 0 : i32
    %c0_i32_0 = arith.constant 0 : i32
    %c0_i32_1 = arith.constant 0 : i32
    return %c0_i32, %c0_i32_0 : i32, i32
  }
  func.func @transform_2(%arg0: i32) -> (i32, i32) {
    %c0_i32 = arith.constant 0 : i32
    %c0_i32_0 = arith.constant 0 : i32
    %c0_i32_1 = arith.constant 0 : i32
    return %c0_i32, %c0_i32_0 : i32, i32
  }
  func.func @transform_3(%arg0: i32) -> (i32, i32) {
    %c0_i32 = arith.constant 0 : i32
    %c0_i32_0 = arith.constant 0 : i32
    return %c0_i32, %arg0 : i32, i32
  }
  func.func @transform_4(%arg0: i32) -> (i32, i32, i32) {
    %c0_i32 = arith.constant 0 : i32
    %c0_i32_0 = arith.constant 0 : i32
    %c0_i32_1 = arith.constant 0 : i32
    return %arg0, %c0_i32, %c0_i32_0 : i32, i32, i32
  }
  func.func @transform_5(%arg0: i32) -> (i32, i32, i32) {
    %c0_i32 = arith.constant 0 : i32
    %c0_i32_0 = arith.constant 0 : i32
    %c0_i32_1 = arith.constant 0 : i32
    return %arg0, %c0_i32, %c0_i32_0 : i32, i32, i32
  }
}

module attributes {stable_mosaic.version = 11 : i64} {
  func.func @bn_relu_kernel(%arg0: i32, %arg1: memref<8x512xf32, #tpu.memory_space<vmem>>, %arg2: memref<8x1xf32, #tpu.memory_space<vmem>>, %arg3: memref<8x1xf32, #tpu.memory_space<vmem>>, %arg4: memref<8x512xf32, #tpu.memory_space<vmem>>) attributes {dimension_semantics = [#tpu.dimension_semantics<parallel>], iteration_bounds = array<i64: 2>, scalar_prefetch = 0 : i64, scratch_operands = 0 : i64, tpu.core_type = #tpu.core_type<tc>, window_params = [{transform_indices = @transform_0, window_bounds = array<i64: 8, 512>}, {pipeline_mode = #tpu.pipeline_mode<synchronous>, transform_indices = @transform_1, window_bounds = array<i64: 8, 1>}, {pipeline_mode = #tpu.pipeline_mode<synchronous>, transform_indices = @transform_2, window_bounds = array<i64: 8, 1>}, {transform_indices = @transform_3, window_bounds = array<i64: 8, 512>}]} {
    %c0 = arith.constant 0 : index
    %c0_0 = arith.constant 0 : index
    %0 = vector.load %arg1[%c0, %c0_0] : memref<8x512xf32, #tpu.memory_space<vmem>>, vector<8x512xf32>
    %c0_1 = arith.constant 0 : index
    %c0_2 = arith.constant 0 : index
    %1 = vector.load %arg2[%c0_1, %c0_2] : memref<8x1xf32, #tpu.memory_space<vmem>>, vector<8x1xf32>
    %2 = vector.broadcast %1 : vector<8x1xf32> to vector<8x512xf32>
    %3 = arith.mulf %0, %2 : vector<8x512xf32>
    %c0_3 = arith.constant 0 : index
    %c0_4 = arith.constant 0 : index
    %4 = vector.load %arg3[%c0_3, %c0_4] : memref<8x1xf32, #tpu.memory_space<vmem>>, vector<8x1xf32>
    %5 = vector.broadcast %4 : vector<8x1xf32> to vector<8x512xf32>
    %6 = arith.addf %3, %5 : vector<8x512xf32>
    %cst = arith.constant 0.000000e+00 : f32
    %7 = vector.broadcast %cst : f32 to vector<8x512xf32>
    %8 = arith.maximumf %6, %7 : vector<8x512xf32>
    %c0_5 = arith.constant 0 : index
    %c0_6 = arith.constant 0 : index
    %9 = vector.load %arg4[%c0_5, %c0_6] : memref<8x512xf32, #tpu.memory_space<vmem>>, vector<8x512xf32>
    tpu.vector_store %arg4[%c0_5, %c0_6], %8 {strides = array<i32>} : memref<8x512xf32, #tpu.memory_space<vmem>>, vector<8x512xf32>,
    return
  }
  func.func @transform_0(%arg0: i32) -> (i32, i32) {
    %c0_i32 = arith.constant 0 : i32
    %c0_i32_0 = arith.constant 0 : i32
    return %c0_i32, %arg0 : i32, i32
  }
  func.func @transform_1(%arg0: i32) -> (i32, i32) {
    %c0_i32 = arith.constant 0 : i32
    %c0_i32_0 = arith.constant 0 : i32
    %c0_i32_1 = arith.constant 0 : i32
    return %c0_i32, %c0_i32_0 : i32, i32
  }
  func.func @transform_2(%arg0: i32) -> (i32, i32) {
    %c0_i32 = arith.constant 0 : i32
    %c0_i32_0 = arith.constant 0 : i32
    %c0_i32_1 = arith.constant 0 : i32
    return %c0_i32, %c0_i32_0 : i32, i32
  }
  func.func @transform_3(%arg0: i32) -> (i32, i32) {
    %c0_i32 = arith.constant 0 : i32
    %c0_i32_0 = arith.constant 0 : i32
    return %c0_i32, %arg0 : i32, i32
  }
}

</mosaic_0001>

<llo_original>
// kernel: _single_conv_forward.3
$region0: #{_single_conv_forward.3}
  #allocation0 [shape = 'u32[]', space=smem, size = 0x4, offset = 0x4, fixed_abs, tag = 'smem constant byte address 0x4 - core index']
  #allocation1 [shape = 'u32[144,128]{1,0:T(1,128)}', space=vmem, size = 0x12000, scoped, tag = 'internal scratch']
  %s0 = inlined_call_operand.vmem [shape: f32[8,1024], index: 0, kind: input, shape index: {}, may-alias: {0,3}]
  %s1 = inlined_call_operand.vmem [shape: f32[8,1], index: 1, kind: input, shape index: {}]
  %s2 = inlined_call_operand.vmem [shape: f32[8,1], index: 2, kind: input, shape index: {}]
  %s3 = inlined_call_operand.vmem [shape: f32[8,1024], index: 3, kind: output, shape index: {}, may-alias: {0,3}]
  %s4 = sld [smem:[#allocation0]]
  $region45: #{_single_conv_forward.3} parent=0
    _
  %s6 = ssub.s32 1, %s4
  %s7 = scalar_select 0, %s6, %s4
  loop: start=0, step=1, limit=4
  $region2: #{_single_conv_forward.3} parent=0 // loop_pre_header
    _
  $region3: #{_single_conv_forward.3} parent=0 // loop_header
    %s9 = sphi 0, %s13
    %p10 = scmp.ge.s32.totalorder %s9, 4
    %s19 = sphi 0, %s21
    %s22 = sphi 0, %s19
    %s23 = sphi 0, %s22
    %s39 = sphi 0, %s23
    %s43 = sphi 0, %s43
    %s45 = sphi 0, %s43
    %s46 = sphi 0, %s45
    %s60 = sphi 0, %s46
    %s64 = sphi 0, %s64
    %s66 = sphi 0, %s64
    %s67 = sphi 0, %s66
    %s81 = sphi 0, %s67
    %s87 = sphi 0, %s89
    %s90 = sphi 0, %s87
    %s91 = sphi 0, %s90
    %s107 = sphi 0, %s91
  $region4: #{_single_conv_forward.3} parent=0 // loop_header_branch
    %12 = sbr.rel (%p10) target = $region8
  $region5: #{_single_conv_forward.3} parent=0 // loop_body
    %s14 = ssub.s32 %s9, 1
    %s15 = ssub.s32 %s9, 2
    %s16 = sadd.s32 %s9, 1
    %s17 = ssub.s32 %s9, %s16
    %p18 = scmp.eq.s32.totalorder %s17, 0
    %s20 = sadd.s32 %s19, 1
    %s21 = scalar_select %p18, %s19, %s20
    %p24 = pneg %p18
    %p25 = scmp.eq.s32.totalorder %s9, 1
    %p26 = por %p24, %p25
    %p27 = scmp.ne.s32.totalorder %s19, %s22
    %p28 = scmp.eq.s32.totalorder %s9, 0
    %p29 = por %p27, %p28
    %p30 = scmp.ne.s32.totalorder %s19, %s22
    %p31 = scmp.eq.s32.totalorder %s14, 1
    %p32 = por %p30, %p31
    %p33 = scmp.ne.s32.totalorder %s22, %s23
    %p34 = scmp.eq.s32.totalorder %s14, 0
    %p35 = por %p33, %p34
    %p36 = scmp.ne.s32.totalorder %s22, %s23
    %p37 = scmp.eq.s32.totalorder %s15, 1
    %p38 = por %p36, %p37
    %p40 = scmp.ne.s32.totalorder %s23, %s39
    %p41 = scmp.eq.s32.totalorder %s15, 0
    %p42 = por %p40, %p41
    %s44 = sadd.s32 %s43, 1
    %p47 = scmp.eq.s32.totalorder %s9, 1
    %p48 = scmp.ne.s32.totalorder %s43, %s45
    %p49 = scmp.eq.s32.totalorder %s9, 0
    %p50 = por %p48, %p49
    %p51 = scmp.ne.s32.totalorder %s43, %s45
    %p52 = scmp.eq.s32.totalorder %s14, 1
    %p53 = por %p51, %p52
    %p54 = scmp.ne.s32.totalorder %s45, %s46
    %p55 = scmp.eq.s32.totalorder %s14, 0
    %p56 = por %p54, %p55
    %p57 = scmp.ne.s32.totalorder %s45, %s46
    %p58 = scmp.eq.s32.totalorder %s15, 1
    %p59 = por %p57, %p58
    %p61 = scmp.ne.s32.totalorder %s46, %s60
    %p62 = scmp.eq.s32.totalorder %s15, 0
    %p63 = por %p61, %p62
    %s65 = sadd.s32 %s64, 1
    %p68 = scmp.eq.s32.totalorder %s9, 1
    %p69 = scmp.ne.s32.totalorder %s64, %s66
    %p70 = scmp.eq.s32.totalorder %s9, 0
    %p71 = por %p69, %p70
    %p72 = scmp.ne.s32.totalorder %s64, %s66
    %p73 = scmp.eq.s32.totalorder %s14, 1
    %p74 = por %p72, %p73
    %p75 = scmp.ne.s32.totalorder %s66, %s67
    %p76 = scmp.eq.s32.totalorder %s14, 0
    %p77 = por %p75, %p76
    %p78 = scmp.ne.s32.totalorder %s66, %s67
    %p79 = scmp.eq.s32.totalorder %s15, 1
    %p80 = por %p78, %p79
    %p82 = scmp.ne.s32.totalorder %s67, %s81
    %p83 = scmp.eq.s32.totalorder %s15, 0
    %p84 = por %p82, %p83
    %s85 = ssub.s32 %s9, %s16
    %p86 = scmp.eq.s32.totalorder %s85, 0
    %s88 = sadd.s32 %s87, 1
    %s89 = scalar_select %p86, %s87, %s88
    %p92 = pneg %p86
    %p93 = scmp.eq.s32.totalorder %s9, 1
    %p94 = por %p92, %p93
    %p95 = scmp.ne.s32.totalorder %s87, %s90
    %p96 = scmp.eq.s32.totalorder %s9, 0
    %p97 = por %p95, %p96
    %p98 = scmp.ne.s32.totalorder %s87, %s90
    %p99 = scmp.eq.s32.totalorder %s14, 1
    %p100 = por %p98, %p99
    %p101 = scmp.ne.s32.totalorder %s90, %s91
    %p102 = scmp.eq.s32.totalorder %s14, 0
    %p103 = por %p101, %p102
    %p104 = scmp.ne.s32.totalorder %s90, %s91
    %p105 = scmp.eq.s32.totalorder %s15, 1
    %p106 = por %p104, %p105
    %p108 = scmp.ne.s32.totalorder %s91, %s107
    %p109 = scmp.eq.s32.totalorder %s15, 0
    %p110 = por %p108, %p109
    %p111 = scmp.le.s32.totalorder 1, %s9
    %p112 = scmp.lt.s32.totalorder %s9, 3
    %p113 = pnand %p111, %p112
    %p114 = pneg %p113
    // Predicated region
    $region9: #{_single_conv_forward.3} parent=5 // pred_check
      _
    $region10: #{_single_conv_forward.3} parent=5 // pred_check_branch
      %116 = sbr.rel (%p113) target = $region12
    $region11: #{_single_conv_forward.3} parent=5 // pred_region
      %s117 = ssub.s32 %s9, 1
      // Predicated region
      $region13: #{_single_conv_forward.3} parent=11 // pred_check
        %p118 = pneg %p56
      $region14: #{_single_conv_forward.3} parent=11 // pred_check_branch
        %120 = sbr.rel (%p118) target = $region16
      $region15: #{_single_conv_forward.3} parent=11 // pred_region
        _
      $region16: #{_single_conv_forward.3} parent=11 // pred_fallthru
        _
      // Predicated region
      $region17: #{_single_conv_forward.3} parent=11 // pred_check
        %p121 = pneg %p77
      $region18: #{_single_conv_forward.3} parent=11 // pred_check_branch
        %123 = sbr.rel (%p121) target = $region20
      $region19: #{_single_conv_forward.3} parent=11 // pred_region
        _
      $region20: #{_single_conv_forward.3} parent=11 // pred_fallthru
        _
    $region12: #{_single_conv_forward.3} parent=5 // pred_fallthru
      _
    %p124 = scmp.lt.s32.totalorder %s9, 2
    // Predicated region
    $region21: #{_single_conv_forward.3} parent=5 // pred_check
      %p125 = pneg %p124
    $region22: #{_single_conv_forward.3} parent=5 // pred_check_branch
      %127 = sbr.rel (%p125) target = $region24
    $region23: #{_single_conv_forward.3} parent=5 // pred_region
      // Predicated region
      $region25: #{_single_conv_forward.3} parent=23 // pred_check
        %p128 = pneg %p29
      $region26: #{_single_conv_forward.3} parent=23 // pred_check_branch
        %130 = sbr.rel (%p128) target = $region28
      $region27: #{_single_conv_forward.3} parent=23 // pred_region
        %s131 = smul.u32 4, %s9
        %p132 = scmp.lt.s32.totalorder %s131, 7
        %s133 = scalar_select %p132, %s131, 7
        %s134 = smul.addr %s133, 8
        %s135 = scalar_lea.vmem %s0, %s134
        %s136 = smul.u32 4, %s9
      $region28: #{_single_conv_forward.3} parent=23 // pred_fallthru
        _
    $region24: #{_single_conv_forward.3} parent=5 // pred_fallthru
      _
    %p137 = scmp.le.s32.totalorder 1, %s9
    %p138 = scmp.lt.s32.totalorder %s9, 3
    %p139 = pnand %p137, %p138
    %p140 = pneg %p139
    // Predicated region
    $region29: #{_single_conv_forward.3} parent=5 // pred_check
      _
    $region30: #{_single_conv_forward.3} parent=5 // pred_check_branch
      %142 = sbr.rel (%p139) target = $region32
    $region31: #{_single_conv_forward.3} parent=5 // pred_region
      %s143 = ssub.s32 %s9, 1
      %s144 = smul.u32 4, %s14
      %p145 = scmp.lt.s32.totalorder %s144, 7
      %s146 = scalar_select %p145, %s144, 7
      %s147 = smul.addr %s146, 8
      %s148 = scalar_lea.vmem %s0, %s147
      %p149 = pneg %p35
      %p150 = pneg %p32
      %p151 = pneg %p56
      %p152 = pneg %p53
      %p153 = pneg %p77
      %p154 = pneg %p74
      %p155 = pneg %p103
      %p156 = pneg %p100
      %s157 = smul.u32 4, %s14
      %p158 = scmp.lt.s32.totalorder %s157, 7
      %s159 = scalar_select %p158, %s157, 7
      %s160 = smul.addr %s159, 8
      %s161 = scalar_lea.vmem %s3, %s160
      %s162 = smul.u32 4, %s14
      %p163 = scmp.lt.s32.totalorder %s162, 7
      %s164 = scalar_select %p163, %s162, 7
      %s165 = smul.addr %s164, 8
      %s166 = scalar_lea.vmem %s0, %s165
      %s167 = smul.u32 4, %s14
      %s168 = smul.u32 4, %s14
      %p169 = scmp.lt.s32.totalorder %s168, 7
      %s170 = scalar_select %p169, %s168, 7
      %s171 = smul.addr %s170, 8
      %s172 = scalar_lea.vmem %s3, %s171
      %s173 = smul.u32 4, %s14
      %v174 = vld [vmem:[%s166] sm:$0xff]
      %v175 = vld [vmem:[%s166 + $0x8] sm:$0xff]
      %v176 = vld [vmem:[%s166 + $0x10] sm:$0xff]
      %v177 = vld [vmem:[%s166 + $0x18] sm:$0xff]
      %v178 = vld [vmem:[%s1] sm:$0xff]
      %180 = vset.pattern.permute.xlu0 0
      %181 = vperm.xlu0 %180, %v178
      %v182 = vpop.permute.xlu0 %181
      %v184 = vmul.f32 %v174, %v182
      %v185 = vmul.f32 %v175, %v182
      %v186 = vmul.f32 %v176, %v182
      %v187 = vmul.f32 %v177, %v182
      %v188 = vld [vmem:[%s2] sm:$0xff]
      %190 = vset.pattern.permute.xlu0 0
      %191 = vperm.xlu0 %190, %v188
      %v192 = vpop.permute.xlu0 %191
      %v194 = vadd.f32 %v184, %v192
      %v195 = vadd.f32 %v185, %v192
      %v196 = vadd.f32 %v186, %v192
      %v197 = vadd.f32 %v187, %v192
      %v198 = vmax.f32 %v194, 0.0
      %v199 = vmax.f32 %v195, 0.0
      %v200 = vmax.f32 %v196, 0.0
      %v201 = vmax.f32 %v197, 0.0
      %202 = vst [vmem:[%s172] sm:$0xff] %v198
      %203 = vst [vmem:[%s172 + $0x8] sm:$0xff] %v199
      %204 = vst [vmem:[%s172 + $0x10] sm:$0xff] %v200
      %205 = vst [vmem:[%s172 + $0x18] sm:$0xff] %v201
      %s206 = smul.u32 4, %s14
      %p207 = scmp.lt.s32.totalorder %s206, 7
      %s208 = scalar_select %p207, %s206, 7
      %s209 = smul.addr %s208, 8
      %s210 = scalar_lea.vmem %s3, %s209
      // Predicated region
      $region33: #{_single_conv_forward.3} parent=31 // pred_check
        %p211 = pneg %p100
      $region34: #{_single_conv_forward.3} parent=31 // pred_check_branch
        %213 = sbr.rel (%p211) target = $region36
      $region35: #{_single_conv_forward.3} parent=31 // pred_region
        %s214 = smul.u32 4, %s14
      $region36: #{_single_conv_forward.3} parent=31 // pred_fallthru
        _
    $region32: #{_single_conv_forward.3} parent=5 // pred_fallthru
      _
    %p215 = scmp.le.s32.totalorder 2, %s9
    // Predicated region
    $region37: #{_single_conv_forward.3} parent=5 // pred_check
      %p216 = pneg %p215
    $region38: #{_single_conv_forward.3} parent=5 // pred_check_branch
      %218 = sbr.rel (%p216) target = $region40
    $region39: #{_single_conv_forward.3} parent=5 // pred_region
      %s219 = ssub.s32 %s9, 2
      // Predicated region
      $region41: #{_single_conv_forward.3} parent=39 // pred_check
        %p220 = pneg %p106
      $region42: #{_single_conv_forward.3} parent=39 // pred_check_branch
        %222 = sbr.rel (%p220) target = $region44
      $region43: #{_single_conv_forward.3} parent=39 // pred_region
        %s223 = smul.u32 4, %s15
        %p224 = scmp.lt.s32.totalorder %s223, 7
        %s225 = scalar_select %p224, %s223, 7
        %s226 = smul.addr %s225, 8
        %s227 = scalar_lea.vmem %s3, %s226
      $region44: #{_single_conv_forward.3} parent=39 // pred_fallthru
        _
    $region40: #{_single_conv_forward.3} parent=5 // pred_fallthru
      _
  $region6: #{_single_conv_forward.3} parent=0 // loop_footer
    %s13 = sadd.s32 1, %s9
  $region7: #{_single_conv_forward.3} parent=0 // loop_footer_branch
    %8 = sbr.rel target = $region3
  $region8: #{_single_conv_forward.3} parent=0 // loop_exit
    _

// kernel: _single_conv_forward.2
$region0: #{_single_conv_forward.2}
  #allocation0 [shape = 'u32[]', space=smem, size = 0x4, offset = 0x4, fixed_abs, tag = 'smem constant byte address 0x4 - core index']
  #allocation1 [shape = 'u32[144,128]{1,0:T(1,128)}', space=vmem, size = 0x12000, scoped, tag = 'internal scratch']
  %s0 = inlined_call_operand.vmem [shape: bf16[108,1024], index: 0, kind: input, shape index: {}]
  %s1 = inlined_call_operand.vmem [shape: bf16[8,108], index: 1, kind: input, shape index: {}]
  %s2 = inlined_call_operand.vmem [shape: f32[8,1], index: 2, kind: input, shape index: {}]
  %s3 = inlined_call_operand.vmem [shape: f32[8,1024], index: 3, kind: output, shape index: {0}]
  %s4 = inlined_call_operand.vmem [shape: f32[2,8,1], index: 4, kind: output, shape index: {1}]
  %s5 = inlined_call_operand.vmem [shape: f32[2,8,1], index: 5, kind: output, shape index: {2}]
  %6 = xla_tuple %s3, %s4, %s5
  %s7 = sld [smem:[#allocation0]]
  $region84: #{_single_conv_forward.2} parent=0
    _
  %s9 = ssub.s32 1, %s7
  %s10 = scalar_select 0, %s9, %s7
  $region1: #{_single_conv_forward.2} parent=0
    #allocation2 [shape = 'u8[229376]{0}', space=vmem, size = 0x38000, scoped, tag = 'input window, operand 0']
    loop: start=0, step=1, limit=4
    $region2: #{_single_conv_forward.2} parent=1 // loop_pre_header
      _
    $region3: #{_single_conv_forward.2} parent=1 // loop_header
      %s12 = sphi 0, %s16
      %p13 = scmp.ge.s32.totalorder %s12, 4
      %s22 = sphi 0, %s24
      %s25 = sphi 0, %s22
      %s26 = sphi 0, %s25
      %s42 = sphi 0, %s26
      %s46 = sphi 0, %s46
      %s48 = sphi 0, %s46
      %s49 = sphi 0, %s48
      %s63 = sphi 0, %s49
      %s67 = sphi 0, %s67
      %s69 = sphi 0, %s67
      %s70 = sphi 0, %s69
      %s84 = sphi 0, %s70
      %s90 = sphi 0, %s92
      %s93 = sphi 0, %s90
      %s94 = sphi 0, %s93
      %s110 = sphi 0, %s94
      %s116 = sphi 0, %s118
      %s119 = sphi 0, %s116
      %s120 = sphi 0, %s119
      %s136 = sphi 0, %s120
      %s142 = sphi 0, %s144
      %s145 = sphi 0, %s142
      %s146 = sphi 0, %s145
      %s162 = sphi 0, %s146
    $region4: #{_single_conv_forward.2} parent=1 // loop_header_branch
      %15 = sbr.rel (%p13) target = $region8
    $region5: #{_single_conv_forward.2} parent=1 // loop_body
      %s17 = ssub.s32 %s12, 1
      %s18 = ssub.s32 %s12, 2
      %s19 = sadd.s32 %s12, 1
      %s20 = ssub.s32 %s12, %s19
      %p21 = scmp.eq.s32.totalorder %s20, 0
      %s23 = sadd.s32 %s22, 1
      %s24 = scalar_select %p21, %s22, %s23
      %p27 = pneg %p21
      %p28 = scmp.eq.s32.totalorder %s12, 1
      %p29 = por %p27, %p28
      %p30 = scmp.ne.s32.totalorder %s22, %s25
      %p31 = scmp.eq.s32.totalorder %s12, 0
      %p32 = por %p30, %p31
      %p33 = scmp.ne.s32.totalorder %s22, %s25
      %p34 = scmp.eq.s32.totalorder %s17, 1
      %p35 = por %p33, %p34
      %p36 = scmp.ne.s32.totalorder %s25, %s26
      %p37 = scmp.eq.s32.totalorder %s17, 0
      %p38 = por %p36, %p37
      %p39 = scmp.ne.s32.totalorder %s25, %s26
      %p40 = scmp.eq.s32.totalorder %s18, 1
      %p41 = por %p39, %p40
      %p43 = scmp.ne.s32.totalorder %s26, %s42
      %p44 = scmp.eq.s32.totalorder %s18, 0
      %p45 = por %p43, %p44
      %s47 = sadd.s32 %s46, 1
      %p50 = scmp.eq.s32.totalorder %s12, 1
      %p51 = scmp.ne.s32.totalorder %s46, %s48
      %p52 = scmp.eq.s32.totalorder %s12, 0
      %p53 = por %p51, %p52
      %p54 = scmp.ne.s32.totalorder %s46, %s48
      %p55 = scmp.eq.s32.totalorder %s17, 1
      %p56 = por %p54, %p55
      %p57 = scmp.ne.s32.totalorder %s48, %s49
      %p58 = scmp.eq.s32.totalorder %s17, 0
      %p59 = por %p57, %p58
      %p60 = scmp.ne.s32.totalorder %s48, %s49
      %p61 = scmp.eq.s32.totalorder %s18, 1
      %p62 = por %p60, %p61
      %p64 = scmp.ne.s32.totalorder %s49, %s63
      %p65 = scmp.eq.s32.totalorder %s18, 0
      %p66 = por %p64, %p65
      %s68 = sadd.s32 %s67, 1
      %p71 = scmp.eq.s32.totalorder %s12, 1
      %p72 = scmp.ne.s32.totalorder %s67, %s69
      %p73 = scmp.eq.s32.totalorder %s12, 0
      %p74 = por %p72, %p73
      %p75 = scmp.ne.s32.totalorder %s67, %s69
      %p76 = scmp.eq.s32.totalorder %s17, 1
      %p77 = por %p75, %p76
      %p78 = scmp.ne.s32.totalorder %s69, %s70
      %p79 = scmp.eq.s32.totalorder %s17, 0
      %p80 = por %p78, %p79
      %p81 = scmp.ne.s32.totalorder %s69, %s70
      %p82 = scmp.eq.s32.totalorder %s18, 1
      %p83 = por %p81, %p82
      %p85 = scmp.ne.s32.totalorder %s70, %s84
      %p86 = scmp.eq.s32.totalorder %s18, 0
      %p87 = por %p85, %p86
      %s88 = ssub.s32 %s12, %s19
      %p89 = scmp.eq.s32.totalorder %s88, 0
      %s91 = sadd.s32 %s90, 1
      %s92 = scalar_select %p89, %s90, %s91
      %p95 = pneg %p89
      %p96 = scmp.eq.s32.totalorder %s12, 1
      %p97 = por %p95, %p96
      %p98 = scmp.ne.s32.totalorder %s90, %s93
      %p99 = scmp.eq.s32.totalorder %s12, 0
      %p100 = por %p98, %p99
      %p101 = scmp.ne.s32.totalorder %s90, %s93
      %p102 = scmp.eq.s32.totalorder %s17, 1
      %p103 = por %p101, %p102
      %p104 = scmp.ne.s32.totalorder %s93, %s94
      %p105 = scmp.eq.s32.totalorder %s17, 0
      %p106 = por %p104, %p105
      %p107 = scmp.ne.s32.totalorder %s93, %s94
      %p108 = scmp.eq.s32.totalorder %s18, 1
      %p109 = por %p107, %p108
      %p111 = scmp.ne.s32.totalorder %s94, %s110
      %p112 = scmp.eq.s32.totalorder %s18, 0
      %p113 = por %p111, %p112
      %s114 = ssub.s32 %s12, %s19
      %p115 = scmp.eq.s32.totalorder %s114, 0
      %s117 = sadd.s32 %s116, 1
      %s118 = scalar_select %p115, %s116, %s117
      %p121 = pneg %p115
      %p122 = scmp.eq.s32.totalorder %s12, 1
      %p123 = por %p121, %p122
      %p124 = scmp.ne.s32.totalorder %s116, %s119
      %p125 = scmp.eq.s32.totalorder %s12, 0
      %p126 = por %p124, %p125
      %p127 = scmp.ne.s32.totalorder %s116, %s119
      %p128 = scmp.eq.s32.totalorder %s17, 1
      %p129 = por %p127, %p128
      %p130 = scmp.ne.s32.totalorder %s119, %s120
      %p131 = scmp.eq.s32.totalorder %s17, 0
      %p132 = por %p130, %p131
      %p133 = scmp.ne.s32.totalorder %s119, %s120
      %p134 = scmp.eq.s32.totalorder %s18, 1
      %p135 = por %p133, %p134
      %p137 = scmp.ne.s32.totalorder %s120, %s136
      %p138 = scmp.eq.s32.totalorder %s18, 0
      %p139 = por %p137, %p138
      %s140 = ssub.s32 %s12, %s19
      %p141 = scmp.eq.s32.totalorder %s140, 0
      %s143 = sadd.s32 %s142, 1
      %s144 = scalar_select %p141, %s142, %s143
      %p147 = pneg %p141
      %p148 = scmp.eq.s32.totalorder %s12, 1
      %p149 = por %p147, %p148
      %p150 = scmp.ne.s32.totalorder %s142, %s145
      %p151 = scmp.eq.s32.totalorder %s12, 0
      %p152 = por %p150, %p151
      %p153 = scmp.ne.s32.totalorder %s142, %s145
      %p154 = scmp.eq.s32.totalorder %s17, 1
      %p155 = por %p153, %p154
      %p156 = scmp.ne.s32.totalorder %s145, %s146
      %p157 = scmp.eq.s32.totalorder %s17, 0
      %p158 = por %p156, %p157
      %p159 = scmp.ne.s32.totalorder %s145, %s146
      %p160 = scmp.eq.s32.totalorder %s18, 1
      %p161 = por %p159, %p160
      %p163 = scmp.ne.s32.totalorder %s146, %s162
      %p164 = scmp.eq.s32.totalorder %s18, 0
      %p165 = por %p163, %p164
      %p166 = scmp.le.s32.totalorder 1, %s12
      %p167 = scmp.lt.s32.totalorder %s12, 3
      %p168 = pnand %p166, %p167
      %p169 = pneg %p168
      // Predicated region
      $region9: #{_single_conv_forward.2} parent=5 // pred_check
        _
      $region10: #{_single_conv_forward.2} parent=5 // pred_check_branch
        %171 = sbr.rel (%p168) target = $region12
      $region11: #{_single_conv_forward.2} parent=5 // pred_region
        %s172 = ssub.s32 %s12, 1
        // Predicated region
        $region13: #{_single_conv_forward.2} parent=11 // pred_check
          %p173 = pneg %p59
        $region14: #{_single_conv_forward.2} parent=11 // pred_check_branch
          %175 = sbr.rel (%p173) target = $region16
        $region15: #{_single_conv_forward.2} parent=11 // pred_region
          _
        $region16: #{_single_conv_forward.2} parent=11 // pred_fallthru
          _
        // Predicated region
        $region17: #{_single_conv_forward.2} parent=11 // pred_check
          %p176 = pneg %p80
        $region18: #{_single_conv_forward.2} parent=11 // pred_check_branch
          %178 = sbr.rel (%p176) target = $region20
        $region19: #{_single_conv_forward.2} parent=11 // pred_region
          _
        $region20: #{_single_conv_forward.2} parent=11 // pred_fallthru
          _
      $region12: #{_single_conv_forward.2} parent=5 // pred_fallthru
        _
      %p179 = scmp.lt.s32.totalorder %s12, 2
      // Predicated region
      $region21: #{_single_conv_forward.2} parent=5 // pred_check
        %p180 = pneg %p179
      $region22: #{_single_conv_forward.2} parent=5 // pred_check_branch
        %182 = sbr.rel (%p180) target = $region24
      $region23: #{_single_conv_forward.2} parent=5 // pred_region
        // Predicated region
        $region25: #{_single_conv_forward.2} parent=23 // pred_check
          %p183 = pneg %p32
        $region26: #{_single_conv_forward.2} parent=23 // pred_check_branch
          %185 = sbr.rel (%p183) target = $region28
        $region27: #{_single_conv_forward.2} parent=23 // pred_region
          %s186 = sand.u32 %s22, 1
          %s187 = sand.u32 %s22, 1
          %s188 = smul.addr %s187, 224
          %s189 = scalar_lea.vmem [#allocation2], %s188
          %s190 = smul.u32 4, %s12
          %s191 = smul.addr %s190, 4
          %s192 = scalar_lea.vmem %s0, %s191
          // Predicated region
          $region29: #{_single_conv_forward.2} parent=27 // pred_check
            _
          $region30: #{_single_conv_forward.2} parent=27 // pred_check_branch
            %194 = sbr.rel (0) target = $region32
          $region31: #{_single_conv_forward.2} parent=27 // pred_region
            // Predicated region
            $region33: #{_single_conv_forward.2} parent=31 // pred_check
              _
            $region34: #{_single_conv_forward.2} parent=31 // pred_check_branch
              %196 = sbr.rel (0) target = $region36
            $region35: #{_single_conv_forward.2} parent=31 // pred_region
              loop: start=0, step=1, limit=1
              $region37: #{_single_conv_forward.2} parent=35 // loop_pre_header
                _
              $region38: #{_single_conv_forward.2} parent=35 // loop_header
                %s198 = sphi 0, %s202
                %p199 = scmp.ge.s32.totalorder %s198, 1
                %s203 = sphi %s192, %s192
                %s204 = sphi %s189, %s189
              $region39: #{_single_conv_forward.2} parent=35 // loop_header_branch
                %201 = sbr.rel (%p199) target = $region43
              $region40: #{_single_conv_forward.2} parent=35 // loop_body
                %v205 = vld [vmem:[%s203] sm:$0xff]
                %206 = vst [vmem:[%s204] sm:$0xff] %v205
                %v207 = vld [vmem:[%s203 + $0x8] sm:$0xff]
                %208 = vst [vmem:[%s204 + $0x8] sm:$0xff] %v207
                %v209 = vld [vmem:[%s203 + $0x20] sm:$0xff]
                %210 = vst [vmem:[%s204 + $0x10] sm:$0xff] %v209
                %v211 = vld [vmem:[%s203 + $0x28] sm:$0xff]
                %212 = vst [vmem:[%s204 + $0x18] sm:$0xff] %v211
                %v213 = vld [vmem:[%s203 + $0x40] sm:$0xff]
                %214 = vst [vmem:[%s204 + $0x20] sm:$0xff] %v213
                %v215 = vld [vmem:[%s203 + $0x48] sm:$0xff]
                %216 = vst [vmem:[%s204 + $0x28] sm:$0xff] %v215
                %v217 = vld [vmem:[%s203 + $0x60] sm:$0xff]
                %218 = vst [vmem:[%s204 + $0x30] sm:$0xff] %v217
                %v219 = vld [vmem:[%s203 + $0x68] sm:$0xff]
                %220 = vst [vmem:[%s204 + $0x38] sm:$0xff] %v219
                %v221 = vld [vmem:[%s203 + $0x80] sm:$0xff]
                %222 = vst [vmem:[%s204 + $0x40] sm:$0xff] %v221
                %v223 = vld [vmem:[%s203 + $0x88] sm:$0xff]
                %224 = vst [vmem:[%s204 + $0x48] sm:$0xff] %v223
                %v225 = vld [vmem:[%s203 + $0xa0] sm:$0xff]
                %226 = vst [vmem:[%s204 + $0x50] sm:$0xff] %v225
                %v227 = vld [vmem:[%s203 + $0xa8] sm:$0xff]
                %228 = vst [vmem:[%s204 + $0x58] sm:$0xff] %v227
                %v229 = vld [vmem:[%s203 + $0xc0] sm:$0xff]
                %230 = vst [vmem:[%s204 + $0x60] sm:$0xff] %v229
                %v231 = vld [vmem:[%s203 + $0xc8] sm:$0xff]
                %232 = vst [vmem:[%s204 + $0x68] sm:$0xff] %v231
                %v233 = vld [vmem:[%s203 + $0xe0] sm:$0xff]
                %234 = vst [vmem:[%s204 + $0x70] sm:$0xff] %v233
                %v235 = vld [vmem:[%s203 + $0xe8] sm:$0xff]
                %236 = vst [vmem:[%s204 + $0x78] sm:$0xff] %v235
                %v237 = vld [vmem:[%s203 + $0x100] sm:$0xff]
                %238 = vst [vmem:[%s204 + $0x80] sm:$0xff] %v237
                %v239 = vld [vmem:[%s203 + $0x108] sm:$0xff]
                %240 = vst [vmem:[%s204 + $0x88] sm:$0xff] %v239
                %v241 = vld [vmem:[%s203 + $0x120] sm:$0xff]
                %242 = vst [vmem:[%s204 + $0x90] sm:$0xff] %v241
                %v243 = vld [vmem:[%s203 + $0x128] sm:$0xff]
                %244 = vst [vmem:[%s204 + $0x98] sm:$0xff] %v243
                %v245 = vld [vmem:[%s203 + $0x140] sm:$0xff]
                %246 = vst [vmem:[%s204 + $0xa0] sm:$0xff] %v245
                %v247 = vld [vmem:[%s203 + $0x148] sm:$0xff]
                %248 = vst [vmem:[%s204 + $0xa8] sm:$0xff] %v247
                %v249 = vld [vmem:[%s203 + $0x160] sm:$0xff]
                %250 = vst [vmem:[%s204 + $0xb0] sm:$0xff] %v249
                %v251 = vld [vmem:[%s203 + $0x168] sm:$0xff]
                %252 = vst [vmem:[%s204 + $0xb8] sm:$0xff] %v251
                %v253 = vld [vmem:[%s203 + $0x180] sm:$0xff]
                %254 = vst [vmem:[%s204 + $0xc0] sm:$0xff] %v253
                %v255 = vld [vmem:[%s203 + $0x188] sm:$0xff]
                %256 = vst [vmem:[%s204 + $0xc8] sm:$0xff] %v255
                %v257 = vld [vmem:[%s203 + $0x1a0] sm:$0xff]
                %258 = vst [vmem:[%s204 + $0xd0] sm:$0xff] %v257
                %v259 = vld [vmem:[%s203 + $0x1a8] sm:$0xff]
                %260 = vst [vmem:[%s204 + $0xd8] sm:$0xff] %v259
              $region41: #{_single_conv_forward.2} parent=35 // loop_footer
                %s202 = sadd.s32 1, %s198
              $region42: #{_single_conv_forward.2} parent=35 // loop_footer_branch
                %197 = sbr.rel target = $region38
              $region43: #{_single_conv_forward.2} parent=35 // loop_exit
                _
            $region36: #{_single_conv_forward.2} parent=31 // pred_fallthru
              _
            // Predicated region
            $region44: #{_single_conv_forward.2} parent=31 // pred_check
              _
            $region45: #{_single_conv_forward.2} parent=31 // pred_check_branch
              %262 = sbr.rel target = $region47
            $region46: #{_single_conv_forward.2} parent=31 // pred_region
              _
            $region47: #{_single_conv_forward.2} parent=31 // pred_fallthru
              _
          $region32: #{_single_conv_forward.2} parent=27 // pred_fallthru
            _
          %263 = vnop
        $region28: #{_single_conv_forward.2} parent=23 // pred_fallthru
          _
      $region24: #{_single_conv_forward.2} parent=5 // pred_fallthru
        _
      %p264 = scmp.le.s32.totalorder 1, %s12
      %p265 = scmp.lt.s32.totalorder %s12, 3
      %p266 = pnand %p264, %p265
      %p267 = pneg %p266
      // Predicated region
      $region48: #{_single_conv_forward.2} parent=5 // pred_check
        _
      $region49: #{_single_conv_forward.2} parent=5 // pred_check_branch
        %269 = sbr.rel (%p266) target = $region51
      $region50: #{_single_conv_forward.2} parent=5 // pred_region
        %s270 = ssub.s32 %s12, 1
        %s271 = sand.u32 %s25, 1
        %s272 = sand.u32 %s25, 1
        %s273 = smul.addr %s272, 224
        %s274 = scalar_lea.vmem [#allocation2], %s273
        // Predicated region
        $region52: #{_single_conv_forward.2} parent=50 // pred_check
          %p275 = pneg %p38
        $region53: #{_single_conv_forward.2} parent=50 // pred_check_branch
          %277 = sbr.rel (%p275) target = $region55
        $region54: #{_single_conv_forward.2} parent=50 // pred_region
          _
        $region55: #{_single_conv_forward.2} parent=50 // pred_fallthru
          _
        %s278 = sand.u32 %s25, 1
        %s279 = sand.u32 %s25, 1
        %s280 = smul.addr %s279, 224
        %s281 = scalar_lea.vmem [#allocation2], %s280
        %p282 = pneg %p38
        %p283 = pneg %p35
        %p284 = pneg %p59
        %p285 = pneg %p56
        %p286 = pneg %p80
        %p287 = pneg %p77
        %p288 = pneg %p106
        %p289 = pneg %p103
        %s290 = smul.u32 4, %s17
        %p291 = scmp.lt.s32.totalorder %s290, 7
        %s292 = scalar_select %p291, %s290, 7
        %s293 = smul.addr %s292, 8
        %s294 = scalar_lea.vmem %s3, %s293
        %p295 = pneg %p132
        %p296 = pneg %p129
        %p297 = scmp.lt.s32.totalorder %s17, 1
        %s298 = scalar_select %p297, %s17, 1
        %s299 = smul.addr %s298, 8
        %s300 = scalar_lea.vmem %s4, %s299
        %p301 = pneg %p158
        %p302 = pneg %p155
        %p303 = scmp.lt.s32.totalorder %s17, 1
        %s304 = scalar_select %p303, %s17, 1
        %s305 = smul.addr %s304, 8
        %s306 = scalar_lea.vmem %s5, %s305
        %s307 = smul.u32 4, %s17
        %s308 = smul.u32 4, %s17
        %p309 = scmp.lt.s32.totalorder %s308, 7
        %s310 = scalar_select %p309, %s308, 7
        %s311 = smul.addr %s310, 8
        %s312 = scalar_lea.vmem %s3, %s311
        %s313 = smul.u32 4, %s17
        %p314 = scmp.lt.s32.totalorder %s17, 1
        %s315 = scalar_select %p314, %s17, 1
        %s316 = smul.addr %s315, 8
        %s317 = scalar_lea.vmem %s4, %s316
        %p318 = scmp.lt.s32.totalorder %s17, 1
        %s319 = scalar_select %p318, %s17, 1
        %s320 = smul.addr %s319, 8
        %s321 = scalar_lea.vmem %s5, %s320
        %v323 = vld [vmem:[%s1] sm:$0xf]
        %v324 = vld [vmem:[%s274] sm:$0xff]
        %v325 = vld [vmem:[%s274 + $0x8] sm:$0xff]
        %v326 = vld [vmem:[%s274 + $0x10] sm:$0xff]
        %v327 = vld [vmem:[%s274 + $0x18] sm:$0xff]
        %v328 = vld [vmem:[%s274 + $0x20] sm:$0xff]
        %v329 = vld [vmem:[%s274 + $0x28] sm:$0xff]
        %v330 = vld [vmem:[%s274 + $0x30] sm:$0xff]
        %v331 = vld [vmem:[%s274 + $0x38] sm:$0xff]
        %v332 = vld [vmem:[%s274 + $0x40] sm:$0xff]
        %v333 = vld [vmem:[%s274 + $0x48] sm:$0xff]
        %v334 = vld [vmem:[%s274 + $0x50] sm:$0xff]
        %v335 = vld [vmem:[%s274 + $0x58] sm:$0xff]
        %v336 = vld [vmem:[%s274 + $0x60] sm:$0xff]
        %v337 = vld [vmem:[%s274 + $0x68] sm:$0xff]
        %v338 = vld [vmem:[%s274 + $0x70] sm:$0xff]
        %v339 = vld [vmem:[%s274 + $0x78] sm:$0xff]
        %v340 = vld [vmem:[%s274 + $0x80] sm:$0xff]
        %v341 = vld [vmem:[%s274 + $0x88] sm:$0xff]
        %v342 = vld [vmem:[%s274 + $0x90] sm:$0xff]
        %v343 = vld [vmem:[%s274 + $0x98] sm:$0xff]
        %v344 = vld [vmem:[%s274 + $0xa0] sm:$0xff]
        %v345 = vld [vmem:[%s274 + $0xa8] sm:$0xff]
        %v346 = vld [vmem:[%s274 + $0xb0] sm:$0xff]
        %v347 = vld [vmem:[%s274 + $0xb8] sm:$0xff]
        %v348 = vld [vmem:[%s274 + $0xc0] sm:$0xff]
        %v349 = vld [vmem:[%s274 + $0xc8] sm:$0xff]
        %v350 = vld [vmem:[%s274 + $0xd0] sm:$0x33]
        %v351 = vld [vmem:[%s274 + $0xd8] sm:$0x33]
        %v380 = vunpack.c.l.b16 %v324
        %v381 = vunpack.c.h.b16 %v324
        %v382 = vunpack.c.l.b16 %v325
        %v383 = vunpack.c.h.b16 %v325
        %v384 = vunpack.c.l.b16 %v326
        %v385 = vunpack.c.h.b16 %v326
        %v386 = vunpack.c.l.b16 %v327
        %v387 = vunpack.c.h.b16 %v327
        %v388 = vunpack.c.l.b16 %v328
        %v389 = vunpack.c.h.b16 %v328
        %v390 = vunpack.c.l.b16 %v329
        %v391 = vunpack.c.h.b16 %v329
        %v392 = vunpack.c.l.b16 %v330
        %v393 = vunpack.c.h.b16 %v330
        %v394 = vunpack.c.l.b16 %v331
        %v395 = vunpack.c.h.b16 %v331
        %v396 = vunpack.c.l.b16 %v332
        %v397 = vunpack.c.h.b16 %v332
        %v398 = vunpack.c.l.b16 %v333
        %v399 = vunpack.c.h.b16 %v333
        %v400 = vunpack.c.l.b16 %v334
        %v401 = vunpack.c.h.b16 %v334
        %v402 = vunpack.c.l.b16 %v335
        %v403 = vunpack.c.h.b16 %v335
        %v404 = vunpack.c.l.b16 %v336
        %v405 = vunpack.c.h.b16 %v336
        %v406 = vunpack.c.l.b16 %v337
        %v407 = vunpack.c.h.b16 %v337
        %v408 = vunpack.c.l.b16 %v338
        %v409 = vunpack.c.h.b16 %v338
        %v410 = vunpack.c.l.b16 %v339
        %v411 = vunpack.c.h.b16 %v339
        %v412 = vunpack.c.l.b16 %v340
        %v413 = vunpack.c.h.b16 %v340
        %v414 = vunpack.c.l.b16 %v341
        %v415 = vunpack.c.h.b16 %v341
        %v416 = vunpack.c.l.b16 %v342
        %v417 = vunpack.c.h.b16 %v342
        %v418 = vunpack.c.l.b16 %v343
        %v419 = vunpack.c.h.b16 %v343
        %v420 = vunpack.c.l.b16 %v344
        %v421 = vunpack.c.h.b16 %v344
        %v422 = vunpack.c.l.b16 %v345
        %v423 = vunpack.c.h.b16 %v345
        %v424 = vunpack.c.l.b16 %v346
        %v425 = vunpack.c.h.b16 %v346
        %v426 = vunpack.c.l.b16 %v347
        %v427 = vunpack.c.h.b16 %v347
        %v428 = vunpack.c.l.b16 %v348
        %v429 = vunpack.c.h.b16 %v348
        %v430 = vunpack.c.l.b16 %v349
        %v431 = vunpack.c.h.b16 %v349
        %v432 = vunpack.c.l.b16 %v350
        %v433 = vunpack.c.h.b16 %v350
        %v434 = vunpack.c.l.b16 %v351
        %v435 = vunpack.c.h.b16 %v351
        %v436 = vpack.c.b16 %v384, %v380
        %v437 = vpack.c.b16 %v385, %v381
        %v438 = vpack.c.b16 %v386, %v382
        %v439 = vpack.c.b16 %v387, %v383
        %v440 = vpack.c.b16 %v392, %v388
        %v441 = vpack.c.b16 %v393, %v389
        %v442 = vpack.c.b16 %v394, %v390
        %v443 = vpack.c.b16 %v395, %v391
        %v444 = vpack.c.b16 %v400, %v396
        %v445 = vpack.c.b16 %v401, %v397
        %v446 = vpack.c.b16 %v402, %v398
        %v447 = vpack.c.b16 %v403, %v399
        %v448 = vpack.c.b16 %v408, %v404
        %v449 = vpack.c.b16 %v409, %v405
        %v450 = vpack.c.b16 %v410, %v406
        %v451 = vpack.c.b16 %v411, %v407
        %v452 = vpack.c.b16 %v416, %v412
        %v453 = vpack.c.b16 %v417, %v413
        %v454 = vpack.c.b16 %v418, %v414
        %v455 = vpack.c.b16 %v419, %v415
        %v456 = vpack.c.b16 %v424, %v420
        %v457 = vpack.c.b16 %v425, %v421
        %v458 = vpack.c.b16 %v426, %v422
        %v459 = vpack.c.b16 %v427, %v423
        %v460 = vpack.c.b16 %v432, %v428
        %v461 = vpack.c.b16 %v433, %v429
        %v462 = vpack.c.b16 %v434, %v430
        %v463 = vpack.c.b16 %v435, %v431
        %vm488 = vcmask 883712
        %v490 = vsel %vm488, %v323, 0
        %vm492 = vcmask 1045504
        %v494 = vsel %vm492, %v460, 0
        %v497 = vsel %vm492, %v461, 0
        %v500 = vsel %vm492, %v462, 0
        %v503 = vsel %vm492, %v463, 0
        %505 = vmatprep.subr.bf16.mxu0 0
        %506 = vmatpush1.bf16.msra.mxu0 0
        %507 = vmatprep.subr.bf16.mxu0 %v497
        %508 = vmatpush1.bf16.msra.mxu0 %v494
        %509 = vmatprep.subr.bf16.mxu0 %v457
        %510 = vmatpush1.bf16.msra.mxu0 %v456
        %511 = vmatprep.subr.bf16.mxu0 %v453
        %512 = vmatpush1.bf16.msra.mxu0 %v452
        %513 = vmatprep.subr.bf16.mxu0 %v449
        %514 = vmatpush1.bf16.msra.mxu0 %v448
        %515 = vmatprep.subr.bf16.mxu0 %v445
        %516 = vmatpush1.bf16.msra.mxu0 %v444
        %517 = vmatprep.subr.bf16.mxu0 %v441
        %518 = vmatpush1.bf16.msra.mxu0 %v440
        %519 = vmatprep.subr.bf16.mxu0 %v437
        %520 = vmatpush1.bf16.msra.mxu0 %v436
        %521 = vmatprep.subr.bf16.mxu0 0
        %522 = vmatpush2.bf16.msra.mxu0 0
        %523 = vmatprep.subr.bf16.mxu0 0
        %524 = vmatpush2.bf16.msra.mxu0 0
        %525 = vmatprep.subr.bf16.mxu0 0
        %526 = vmatpush2.bf16.msra.mxu0 0
        %527 = vmatprep.subr.bf16.mxu0 0
        %528 = vmatpush2.bf16.msra.mxu0 0
        %529 = vmatprep.subr.bf16.mxu0 0
        %530 = vmatpush2.bf16.msra.mxu0 0
        %531 = vmatprep.subr.bf16.mxu0 0
        %532 = vmatpush2.bf16.msra.mxu0 0
        %533 = vmatprep.subr.bf16.mxu0 0
        %534 = vmatpush2.bf16.msra.mxu0 0
        %535 = vmatprep.subr.bf16.mxu0 0
        %536 = vmatpush2.bf16.msra.mxu0 0
        %537 = vmatprep.mubr.bf16.mxu0 0
        %538 = vmatmul.mubr.bf16.gmra.mxu0 %v490
        %v539 = vpop.f32.mrf.mxu0
        %v540 = vadd.f32 0.0, %v539
        %v541 = vpop.f32.mrf.mxu0
        %v542 = vadd.f32 0.0, %v541
        %v543 = vpop.f32.mrf.mxu0
        %v544 = vpop.f32.mrf.mxu0
        %545 = vdwg.mxu0
        %546 = vmatprep.subr.bf16.mxu0 0
        %547 = vmatpush1.bf16.msra.mxu0 0
        %548 = vmatprep.subr.bf16.mxu0 %v503
        %549 = vmatpush1.bf16.msra.mxu0 %v500
        %550 = vmatprep.subr.bf16.mxu0 %v459
        %551 = vmatpush1.bf16.msra.mxu0 %v458
        %552 = vmatprep.subr.bf16.mxu0 %v455
        %553 = vmatpush1.bf16.msra.mxu0 %v454
        %554 = vmatprep.subr.bf16.mxu0 %v451
        %555 = vmatpush1.bf16.msra.mxu0 %v450
        %556 = vmatprep.subr.bf16.mxu0 %v447
        %557 = vmatpush1.bf16.msra.mxu0 %v446
        %558 = vmatprep.subr.bf16.mxu0 %v443
        %559 = vmatpush1.bf16.msra.mxu0 %v442
        %560 = vmatprep.subr.bf16.mxu0 %v439
        %561 = vmatpush1.bf16.msra.mxu0 %v438
        %562 = vmatprep.subr.bf16.mxu0 0
        %563 = vmatpush2.bf16.msra.mxu0 0
        %564 = vmatprep.subr.bf16.mxu0 0
        %565 = vmatpush2.bf16.msra.mxu0 0
        %566 = vmatprep.subr.bf16.mxu0 0
        %567 = vmatpush2.bf16.msra.mxu0 0
        %568 = vmatprep.subr.bf16.mxu0 0
        %569 = vmatpush2.bf16.msra.mxu0 0
        %570 = vmatprep.subr.bf16.mxu0 0
        %571 = vmatpush2.bf16.msra.mxu0 0
        %572 = vmatprep.subr.bf16.mxu0 0
        %573 = vmatpush2.bf16.msra.mxu0 0
        %574 = vmatprep.subr.bf16.mxu0 0
        %575 = vmatpush2.bf16.msra.mxu0 0
        %576 = vmatprep.subr.bf16.mxu0 0
        %577 = vmatpush2.bf16.msra.mxu0 0
        %578 = vmatprep.mubr.bf16.mxu0 0
        %579 = vmatmul.mubr.bf16.gmra.mxu0 %v490
        %v580 = vpop.f32.mrf.mxu0
        %v581 = vadd.f32 0.0, %v580
        %v582 = vpop.f32.mrf.mxu0
        %v583 = vadd.f32 0.0, %v582
        %v584 = vpop.f32.mrf.mxu0
        %v585 = vpop.f32.mrf.mxu0
        %586 = vdwg.mxu0
        %v587 = vadd.f32 %v540, %v542
        %v588 = vadd.f32 %v587, %v581
        %v589 = vadd.f32 %v588, %v583
        %590 = vadd.xlane.f32.xlu0 %v589
        %v591 = vpop.xlane.xlu0 %590
        %vm592 = vcmask 7168
        %593 = vst.msk [vmem:[%s317] sm:$0xff] %vm592, %v591
        %v594 = vmul.f32 %v540, %v540
        %v595 = vmul.f32 %v542, %v542
        %v596 = vmul.f32 %v581, %v581
        %v597 = vmul.f32 %v583, %v583
        %v598 = vadd.f32 %v594, %v595
        %v599 = vadd.f32 %v598, %v596
        %v600 = vadd.f32 %v599, %v597
        %601 = vadd.xlane.f32.xlu0 %v600
        %v602 = vpop.xlane.xlu0 %601
        %603 = vst.msk [vmem:[%s321] sm:$0xff] %vm592, %v602
        %v604 = vld [vmem:[%s2] sm:$0xff]
        %606 = vset.pattern.permute.xlu0 0
        %607 = vperm.xlu0 %606, %v604
        %v608 = vpop.permute.xlu0 %607
        %v610 = vadd.f32 %v540, %v608
        %v611 = vadd.f32 %v542, %v608
        %v612 = vadd.f32 %v581, %v608
        %v613 = vadd.f32 %v583, %v608
        %614 = vst [vmem:[%s312] sm:$0xff] %v610
        %615 = vst [vmem:[%s312 + $0x8] sm:$0xff] %v611
        %616 = vst [vmem:[%s312 + $0x10] sm:$0xff] %v612
        %617 = vst [vmem:[%s312 + $0x18] sm:$0xff] %v613
        %s618 = smul.u32 4, %s17
        %p619 = scmp.lt.s32.totalorder %s618, 7
        %s620 = scalar_select %p619, %s618, 7
        %s621 = smul.addr %s620, 8
        %s622 = scalar_lea.vmem %s3, %s621
        %p623 = scmp.lt.s32.totalorder %s17, 1
        %s624 = scalar_select %p623, %s17, 1
        %s625 = smul.addr %s624, 8
        %s626 = scalar_lea.vmem %s4, %s625
        %p627 = scmp.lt.s32.totalorder %s17, 1
        %s628 = scalar_select %p627, %s17, 1
        %s629 = smul.addr %s628, 8
        %s630 = scalar_lea.vmem %s5, %s629
        // Predicated region
        $region56: #{_single_conv_forward.2} parent=50 // pred_check
          %p631 = pneg %p103
        $region57: #{_single_conv_forward.2} parent=50 // pred_check_branch
          %633 = sbr.rel (%p631) target = $region59
        $region58: #{_single_conv_forward.2} parent=50 // pred_region
          %s634 = smul.u32 4, %s17
        $region59: #{_single_conv_forward.2} parent=50 // pred_fallthru
          _
        // Predicated region
        $region60: #{_single_conv_forward.2} parent=50 // pred_check
          %p635 = pneg %p129
        $region61: #{_single_conv_forward.2} parent=50 // pred_check_branch
          %637 = sbr.rel (%p635) target = $region63
        $region62: #{_single_conv_forward.2} parent=50 // pred_region
          _
        $region63: #{_single_conv_forward.2} parent=50 // pred_fallthru
          _
        // Predicated region
        $region64: #{_single_conv_forward.2} parent=50 // pred_check
          %p638 = pneg %p155
        $region65: #{_single_conv_forward.2} parent=50 // pred_check_branch
          %640 = sbr.rel (%p638) target = $region67
        $region66: #{_single_conv_forward.2} parent=50 // pred_region
          _
        $region67: #{_single_conv_forward.2} parent=50 // pred_fallthru
          _
      $region51: #{_single_conv_forward.2} parent=5 // pred_fallthru
        _
      %p641 = scmp.le.s32.totalorder 2, %s12
      // Predicated region
      $region68: #{_single_conv_forward.2} parent=5 // pred_check
        %p642 = pneg %p641
      $region69: #{_single_conv_forward.2} parent=5 // pred_check_branch
        %644 = sbr.rel (%p642) target = $region71
      $region70: #{_single_conv_forward.2} parent=5 // pred_region
        %s645 = ssub.s32 %s12, 2
        // Predicated region
        $region72: #{_single_conv_forward.2} parent=70 // pred_check
          %p646 = pneg %p109
        $region73: #{_single_conv_forward.2} parent=70 // pred_check_branch
          %648 = sbr.rel (%p646) target = $region75
        $region74: #{_single_conv_forward.2} parent=70 // pred_region
          %s649 = smul.u32 4, %s18
          %p650 = scmp.lt.s32.totalorder %s649, 7
          %s651 = scalar_select %p650, %s649, 7
          %s652 = smul.addr %s651, 8
          %s653 = scalar_lea.vmem %s3, %s652
        $region75: #{_single_conv_forward.2} parent=70 // pred_fallthru
          _
        // Predicated region
        $region76: #{_single_conv_forward.2} parent=70 // pred_check
          %p654 = pneg %p135
        $region77: #{_single_conv_forward.2} parent=70 // pred_check_branch
          %656 = sbr.rel (%p654) target = $region79
        $region78: #{_single_conv_forward.2} parent=70 // pred_region
          %p657 = scmp.lt.s32.totalorder %s18, 1
          %s658 = scalar_select %p657, %s18, 1
          %s659 = smul.addr %s658, 8
          %s660 = scalar_lea.vmem %s4, %s659
        $region79: #{_single_conv_forward.2} parent=70 // pred_fallthru
          _
        // Predicated region
        $region80: #{_single_conv_forward.2} parent=70 // pred_check
          %p661 = pneg %p161
        $region81: #{_single_conv_forward.2} parent=70 // pred_check_branch
          %663 = sbr.rel (%p661) target = $region83
        $region82: #{_single_conv_forward.2} parent=70 // pred_region
          %p664 = scmp.lt.s32.totalorder %s18, 1
          %s665 = scalar_select %p664, %s18, 1
          %s666 = smul.addr %s665, 8
          %s667 = scalar_lea.vmem %s5, %s666
        $region83: #{_single_conv_forward.2} parent=70 // pred_fallthru
          _
      $region71: #{_single_conv_forward.2} parent=5 // pred_fallthru
        _
    $region6: #{_single_conv_forward.2} parent=1 // loop_footer
      %s16 = sadd.s32 1, %s12
    $region7: #{_single_conv_forward.2} parent=1 // loop_footer_branch
      %11 = sbr.rel target = $region3
    $region8: #{_single_conv_forward.2} parent=1 // loop_exit
      _

</llo_original>
